<compile_context>
chip_gen: v7x
topology: tpu7x:2x2x1
jax: 0.10.0
libtpu: 0.0.40
codegen_flags: <defaults>
</compile_context>

<pallas_src>
import functools

import jax
import jax.numpy as jnp
from jax.experimental import pallas as pl
from jax.experimental.pallas import tpu as pltpu

_LANE = 128
_FUSED_VMEM_BUDGET = 40 * 1024 * 1024   # conservative: safe under v7x's 64 MiB


def _round_up(x, m):
    return ((x + m - 1) // m) * m


def _fused_vmem_estimate(n, d, use_bf16):
    """Rough VMEM bytes for the fused path (inputs double-buffered)."""
    np_, dp = _round_up(n, _LANE), _round_up(d, _LANE)
    ob = 2 if use_bf16 else 4
    return (2 * np_ * np_ * ob          # adjacency (x2 buffers)
            + 2 * np_ * dp * 4          # item embedding
            + 2 * np_ * dp * 4          # running-sum output
            + 2 * np_ * dp * 4          # per-layer output block
            + np_ * dp * ob)            # current-embedding scratch


# ---------------------------------------------------------------------------
# Fused path: one pallas_call, grid = (num_layers,), adjacency VMEM-resident.
# ---------------------------------------------------------------------------
def _fused_encoder_kernel(adj_ref, emb_ref, sum_ref, layer_ref, cur_ref):
    """Grid step l: embeds[l+1] = adj @ embeds[l]; running sum += embeds[l+1].

    adj_ref   : (Np, Np) bf16/f32 input, constant block index -> VMEM resident
    emb_ref   : (Np, Dp) f32 input, item embedding (only read at l == 0)
    sum_ref   : (Np, Dp) f32 output, resident accumulator (constant block idx)
    layer_ref : (Np, Dp) f32 output slice of the stacked (L, Np, Dp) array
    cur_ref   : (Np, Dp) VMEM scratch carrying the current layer's embedding
    """
    l = pl.program_id(0)

    @pl.when(l == 0)
    def _():
        e = emb_ref[...]
        sum_ref[...] = e                          # sum starts with embeds[0]
        cur_ref[...] = e.astype(cur_ref.dtype)

    prop = jnp.dot(adj_ref[...], cur_ref[...],
                   preferred_element_type=jnp.float32)
    sum_ref[...] = sum_ref[...] + prop
    cur_ref[...] = prop.astype(cur_ref.dtype)     # feed next layer
    layer_ref[...] = prop


@functools.partial(jax.jit, static_argnames=("num_layers", "use_bf16"))
def _fused_encoder(adj, item_emb, num_layers, use_bf16):
    n, d = item_emb.shape
    np_, dp = _round_up(n, _LANE), _round_up(d, _LANE)
    op_dtype = jnp.bfloat16 if use_bf16 else jnp.float32

    adj_p = jnp.zeros((np_, np_), op_dtype).at[:n, :n].set(adj.astype(op_dtype))
    emb_p = jnp.zeros((np_, dp), jnp.float32).at[:n, :d].set(
        item_emb.astype(jnp.float32))

    est = _fused_vmem_estimate(n, d, use_bf16)
    vmem_limit = int(min(max(est + (4 << 20), 16 << 20), 64 << 20))

    sum_out, layers = pl.pallas_call(
        _fused_encoder_kernel,
        out_shape=(
            jax.ShapeDtypeStruct((np_, dp), jnp.float32),
            jax.ShapeDtypeStruct((num_layers, np_, dp), jnp.float32),
        ),
        grid_spec=pltpu.PrefetchScalarGridSpec(
            num_scalar_prefetch=0,
            grid=(num_layers,),
            in_specs=[
                pl.BlockSpec((np_, np_), lambda l: (0, 0)),   # adj (resident)
                pl.BlockSpec((np_, dp), lambda l: (0, 0)),    # item embedding
            ],
            out_specs=[
                pl.BlockSpec((np_, dp), lambda l: (0, 0)),          # run. sum
                pl.BlockSpec((None, np_, dp), lambda l: (l, 0, 0)),  # layer l+1
            ],
            scratch_shapes=[pltpu.VMEM((np_, dp), op_dtype)],
        ),
        compiler_params=pltpu.CompilerParams(
            dimension_semantics=("arbitrary",),     # layers are sequential
            vmem_limit_bytes=vmem_limit,
        ),
    )(adj_p, emb_p)

    return (sum_out[:n, :d].astype(item_emb.dtype),
            layers[:, :n, :d].astype(item_emb.dtype))


# ---------------------------------------------------------------------------
# Tiled fallback: per-layer matmul, accumulator lives in the resident output.
# ---------------------------------------------------------------------------
def _gcn_step_kernel(adj_ref, e_ref, s_ref, out_ref, sum_ref):
    """One (tm, tn) output tile of  out = adj @ e ;  sum = s_prev + out."""
    k = pl.program_id(2)

    @pl.when(k == 0)
    def _():
        out_ref[...] = jnp.zeros_like(out_ref)

    out_ref[...] += jnp.dot(adj_ref[...], e_ref[...],
                            preferred_element_type=jnp.float32)

    @pl.when(k == pl.num_programs(2) - 1)
    def _():
        sum_ref[...] = s_ref[...] + out_ref[...]


@functools.partial(jax.jit, static_argnames=("tm", "tn", "tk"))
def _gcn_step(adj_p, emb_p, sum_p, *, tm, tn, tk):
    np_ = adj_p.shape[0]
    dp = emb_p.shape[1]
    grid = (np_ // tm, dp // tn, np_ // tk)
    return pl.pallas_call(
        _gcn_step_kernel,
        out_shape=(
            jax.ShapeDtypeStruct((np_, dp), jnp.float32),   # propagated
            jax.ShapeDtypeStruct((np_, dp), jnp.float32),   # new running sum
        ),
        grid_spec=pltpu.PrefetchScalarGridSpec(
            num_scalar_prefetch=0,
            grid=grid,
            in_specs=[
                pl.BlockSpec((tm, tk), lambda i, j, k: (i, k)),   # adj
                pl.BlockSpec((tk, tn), lambda i, j, k: (k, j)),   # embeddings
                pl.BlockSpec((tm, tn), lambda i, j, k: (i, j)),   # prev sum
            ],
            out_specs=[
                pl.BlockSpec((tm, tn), lambda i, j, k: (i, j)),
                pl.BlockSpec((tm, tn), lambda i, j, k: (i, j)),
            ],
        ),
        input_output_aliases={2: 1},   # reuse the running-sum HBM buffer
        compiler_params=pltpu.CompilerParams(
            dimension_semantics=("parallel", "parallel", "arbitrary"),
            vmem_limit_bytes=32 * 1024 * 1024,
        ),
    )(adj_p, emb_p, sum_p)


def _tiled_encoder(adj, item_emb, num_layers, use_bf16):
    n, d = item_emb.shape
    # 256-wide operand tiles feed the v6e/v7x MXU; for tiny N keep 128 so the
    # v7x megacore still sees >=2 parallel row blocks.
    tile = 256 if n > 256 else 128
    tm = tk = tile
    tn = _LANE
    np_ = _round_up(n, tile)
    dp = _round_up(d, tn)
    op_dtype = jnp.bfloat16 if use_bf16 else jnp.float32

    adj_p = jnp.zeros((np_, np_), op_dtype).at[:n, :n].set(adj.astype(op_dtype))
    emb_p = jnp.zeros((np_, dp), jnp.float32).at[:n, :d].set(
        item_emb.astype(jnp.float32))

    embeds = [item_emb]
    cur = emb_p
    run_sum = emb_p
    for _ in range(num_layers):
        cur, run_sum = _gcn_step(adj_p, cur.astype(op_dtype), run_sum,
                                 tm=tm, tn=tn, tk=tk)
        embeds.append(cur[:n, :d].astype(item_emb.dtype))
    return run_sum[:n, :d].astype(item_emb.dtype), embeds


# ---------------------------------------------------------------------------
# Public forward (mirrors Encoder.forward).
# ---------------------------------------------------------------------------
def encoder_forward(item_emb, encoder_adj, num_gcn_layers, *,
                    use_bf16=True, force_tiled=False):
    """Returns (sum(embeds), embeds_list) like Encoder.forward."""
    if num_gcn_layers == 0:
        return item_emb, [item_emb]
    n, d = item_emb.shape
    fits = _fused_vmem_estimate(n, d, use_bf16) <= _FUSED_VMEM_BUDGET
    if force_tiled or not fits:
        return _tiled_encoder(encoder_adj, item_emb, num_gcn_layers, use_bf16)
    summed, layers = _fused_encoder(encoder_adj, item_emb,
                                    num_layers=num_gcn_layers,
                                    use_bf16=use_bf16)
    embeds = [item_emb] + [layers[i] for i in range(num_gcn_layers)]
    return summed, embeds


def xavier_uniform(key, shape, dtype=jnp.float32):
    fan_in, fan_out = shape
    bound = (6.0 / (fan_in + fan_out)) ** 0.5
    return jax.random.uniform(key, shape, dtype, minval=-bound, maxval=bound)


if __name__ == "__main__":
    # Small config consistent with the module.
    item_num = 255                  # -> N = item_num + 1 = 256 nodes
    embedding_size = 128
    num_gcn_layers = 2

    N = item_num + 1
    key = jax.random.PRNGKey(0)
    k_emb, k_adj = jax.random.split(key)

    # Parameter: item embedding table (xavier_uniform, deterministic).
    item_emb = xavier_uniform(k_emb, (N, embedding_size))

    # Input: deterministic symmetric-normalized (dense) adjacency matrix.
    mask = (jax.random.uniform(k_adj, (N, N)) < 0.05).astype(jnp.float32)
    adj = jnp.maximum(mask, mask.T) + jnp.eye(N, dtype=jnp.float32)
    deg = jnp.sum(adj, axis=1, keepdims=True)
    d_inv_sqrt = 1.0 / jnp.sqrt(jnp.maximum(deg, 1.0))
    encoder_adj = adj * d_inv_sqrt * d_inv_sqrt.T

    # Plain-JAX f32 reference.
    ref_embeds = [item_emb]
    for _ in range(num_gcn_layers):
        ref_embeds.append(encoder_adj @ ref_embeds[-1])
    ref_sum = sum(ref_embeds)

    # Fused (adjacency-VMEM-resident) path.
    summed, embeds_list = encoder_forward(item_emb, encoder_adj,
                                          num_gcn_layers)
    summed = jax.block_until_ready(summed)
    embeds_list = [jax.block_until_ready(e) for e in embeds_list]

    assert summed.shape == (N, embedding_size)
    assert len(embeds_list) == num_gcn_layers + 1
    assert jnp.allclose(summed, ref_sum, atol=1e-2, rtol=1e-2)
    for got, ref in zip(embeds_list, ref_embeds):
        assert jnp.allclose(got, ref, atol=1e-2, rtol=1e-2)

    # Tiled fallback path (exercised explicitly for coverage).
    summed_t, embeds_t = encoder_forward(item_emb, encoder_adj,
                                         num_gcn_layers, force_tiled=True)
    summed_t = jax.block_until_ready(summed_t)
    assert jnp.allclose(summed_t, ref_sum, atol=1e-2, rtol=1e-2)
    for got, ref in zip(embeds_t, ref_embeds):
        assert jnp.allclose(got, ref, atol=1e-2, rtol=1e-2)

    print("KERNEL_OK")
</pallas_src>

<mosaic_0001>
module attributes {stable_mosaic.version = 11 : i64} {
  func.func @_fused_encoder_kernel(%arg0: i32, %arg1: memref<256x256xbf16, #tpu.memory_space<vmem>>, %arg2: memref<256x128xf32, #tpu.memory_space<vmem>>, %arg3: memref<256x128xf32, #tpu.memory_space<vmem>>, %arg4: memref<1x256x128xf32, #tpu.memory_space<vmem>>, %arg5: memref<256x128xbf16, #tpu.memory_space<vmem>>) attributes {dimension_semantics = [#tpu.dimension_semantics<arbitrary>], iteration_bounds = array<i64: 2>, scalar_prefetch = 0 : i64, scratch_operands = 1 : i64, tpu.core_type = #tpu.core_type<tc>, window_params = [{pipeline_mode = #tpu.pipeline_mode<synchronous>, transform_indices = @transform_0, window_bounds = array<i64: 256, 256>}, {pipeline_mode = #tpu.pipeline_mode<synchronous>, transform_indices = @transform_1, window_bounds = array<i64: 256, 128>}, {pipeline_mode = #tpu.pipeline_mode<synchronous>, transform_indices = @transform_2, window_bounds = array<i64: 256, 128>}, {transform_indices = @transform_3, window_bounds = array<i64: 1, 256, 128>}]} {
    %c0_i32 = arith.constant 0 : i32
    %0 = arith.cmpi eq, %arg0, %c0_i32 : i32
    %1 = arith.extui %0 : i1 to i32
    %c0_i32_0 = arith.constant 0 : i32
    %2 = arith.cmpi ne, %1, %c0_i32_0 : i32
    scf.if %2 {
      %c0_13 = arith.constant 0 : index
      %c0_14 = arith.constant 0 : index
      %14 = vector.load %arg2[%c0_13, %c0_14] : memref<256x128xf32, #tpu.memory_space<vmem>>, vector<256x128xf32>
      %c0_15 = arith.constant 0 : index
      %c0_16 = arith.constant 0 : index
      %15 = vector.load %arg3[%c0_15, %c0_16] : memref<256x128xf32, #tpu.memory_space<vmem>>, vector<256x128xf32>
      tpu.vector_store %arg3[%c0_15, %c0_16], %14 {strides = array<i32>} : memref<256x128xf32, #tpu.memory_space<vmem>>, vector<256x128xf32>,
      %16 = arith.truncf %14 : vector<256x128xf32> to vector<256x128xbf16>
      %c0_17 = arith.constant 0 : index
      %c0_18 = arith.constant 0 : index
      %17 = vector.load %arg5[%c0_17, %c0_18] : memref<256x128xbf16, #tpu.memory_space<vmem>>, vector<256x128xbf16>
      tpu.vector_store %arg5[%c0_17, %c0_18], %16 {strides = array<i32>} : memref<256x128xbf16, #tpu.memory_space<vmem>>, vector<256x128xbf16>,
    } else {
    }
    %c0 = arith.constant 0 : index
    %c0_1 = arith.constant 0 : index
    %3 = vector.load %arg1[%c0, %c0_1] : memref<256x256xbf16, #tpu.memory_space<vmem>>, vector<256x256xbf16>
    %c0_2 = arith.constant 0 : index
    %c0_3 = arith.constant 0 : index
    %4 = vector.load %arg5[%c0_2, %c0_3] : memref<256x128xbf16, #tpu.memory_space<vmem>>, vector<256x128xbf16>
    %cst = arith.constant dense<0.000000e+00> : vector<256x128xf32>
    %5 = tpu.matmul %3, %4, %cst {dimension_numbers = #tpu.dot_dimension_numbers<[1], [0], [0], [1], [0, 0, 1, 1], [], []>} : vector<256x256xbf16>, vector<256x128xbf16>, vector<256x128xf32> -> vector<256x128xf32>
    %c0_4 = arith.constant 0 : index
    %c0_5 = arith.constant 0 : index
    %6 = vector.load %arg3[%c0_4, %c0_5] : memref<256x128xf32, #tpu.memory_space<vmem>>, vector<256x128xf32>
    %7 = arith.addf %6, %5 : vector<256x128xf32>
    %c0_6 = arith.constant 0 : index
    %c0_7 = arith.constant 0 : index
    %8 = vector.load %arg3[%c0_6, %c0_7] : memref<256x128xf32, #tpu.memory_space<vmem>>, vector<256x128xf32>
    tpu.vector_store %arg3[%c0_6, %c0_7], %7 {strides = array<i32>} : memref<256x128xf32, #tpu.memory_space<vmem>>, vector<256x128xf32>,
    %9 = arith.truncf %5 : vector<256x128xf32> to vector<256x128xbf16>
    %c0_8 = arith.constant 0 : index
    %c0_9 = arith.constant 0 : index
    %10 = vector.load %arg5[%c0_8, %c0_9] : memref<256x128xbf16, #tpu.memory_space<vmem>>, vector<256x128xbf16>
    tpu.vector_store %arg5[%c0_8, %c0_9], %9 {strides = array<i32>} : memref<256x128xbf16, #tpu.memory_space<vmem>>, vector<256x128xbf16>,
    %c0_10 = arith.constant 0 : index
    %c0_11 = arith.constant 0 : index
    %c0_12 = arith.constant 0 : index
    %11 = vector.load %arg4[%c0_10, %c0_11, %c0_12] : memref<1x256x128xf32, #tpu.memory_space<vmem>>, vector<1x256x128xf32>
    %12 = vector.shape_cast %11 : vector<1x256x128xf32> to vector<256x128xf32>
    %13 = vector.shape_cast %5 : vector<256x128xf32> to vector<1x256x128xf32>
    tpu.vector_store %arg4[%c0_10, %c0_11, %c0_12], %13 {strides = array<i32>} : memref<1x256x128xf32, #tpu.memory_space<vmem>>, vector<1x256x128xf32>,
    return
  }
  func.func @transform_0(%arg0: i32) -> (i32, i32) {
    %c0_i32 = arith.constant 0 : i32
    %c0_i32_0 = arith.constant 0 : i32
    %c0_i32_1 = arith.constant 0 : i32
    return %c0_i32, %c0_i32_0 : i32, i32
  }
  func.func @transform_1(%arg0: i32) -> (i32, i32) {
    %c0_i32 = arith.constant 0 : i32
    %c0_i32_0 = arith.constant 0 : i32
    %c0_i32_1 = arith.constant 0 : i32
    return %c0_i32, %c0_i32_0 : i32, i32
  }
  func.func @transform_2(%arg0: i32) -> (i32, i32) {
    %c0_i32 = arith.constant 0 : i32
    %c0_i32_0 = arith.constant 0 : i32
    %c0_i32_1 = arith.constant 0 : i32
    return %c0_i32, %c0_i32_0 : i32, i32
  }
  func.func @transform_3(%arg0: i32) -> (i32, i32, i32) {
    %c0_i32 = arith.constant 0 : i32
    %c0_i32_0 = arith.constant 0 : i32
    %c0_i32_1 = arith.constant 0 : i32
    return %arg0, %c0_i32, %c0_i32_0 : i32, i32, i32
  }
}

</mosaic_0001>

<llo_original>
// kernel: _fused_encoder.1
$region0: #{_fused_encoder.1}
  #allocation0 [shape = 'u32[]', space=smem, size = 0x4, offset = 0x4, fixed_abs, tag = 'smem constant byte address 0x4 - core index']
  #allocation1 [shape = 'u32[144,128]{1,0:T(1,128)}', space=vmem, size = 0x12000, scoped, tag = 'internal scratch']
  #allocation2 [shape = 'bf16[256,128]{1,0:T(16,128)(2,1)}', space=vmem, size = 0x10000, scoped, tag = 'scratch operand']
  %s0 = inlined_call_operand.vmem [shape: bf16[256,256], index: 0, kind: input, shape index: {}]
  %s1 = inlined_call_operand.vmem [shape: f32[256,128], index: 1, kind: input, shape index: {}]
  %s2 = inlined_call_operand.hbm [shape: f32[256,128], index: 2, kind: output, shape index: {0}]
  %s3 = inlined_call_operand.hbm [shape: f32[2,256,128], index: 3, kind: output, shape index: {1}]
  %4 = xla_tuple %s2, %s3
  %s5 = sld [smem:[#allocation0]]
  $region53: #{_fused_encoder.1} parent=0
    _
  %s7 = ssub.s32 1, %s5
  %s8 = scalar_select 0, %s7, %s5
  $region1: #{_fused_encoder.1} parent=0
    #allocation3 [shape = 'u8[131072]{0}', space=vmem, size = 0x20000, scoped, tag = 'output window, operand 0, single buffered']
    #allocation4 [shape = 's32[2]{0}', space=sflag, size = 0x8, scoped, tag = 'scoped memory for _fused_encoder.1']
    #allocation5 [shape = 'u8[262144]{0}', space=vmem, size = 0x40000, scoped, tag = 'output window, operand 1']
    #allocation6 [shape = 's32[2]{0}', space=sflag, size = 0x8, scoped, tag = 'scoped memory for _fused_encoder.1']
    %9 = vsyncpa [#allocation4], 0
    %10 = vsyncpa [#allocation6], 0
    %s11 = scalar_lea.sflag [#allocation6], 1
    %12 = vsyncpa %s11, 0
    loop: start=0, step=1, limit=4
    $region2: #{_fused_encoder.1} parent=1 // loop_pre_header
      _
    $region3: #{_fused_encoder.1} parent=1 // loop_header
      %s14 = sphi 0, %s18
      %p15 = scmp.ge.s32.totalorder %s14, 4
      %s22 = sphi 0, %s22
      %s24 = sphi 0, %s22
      %s25 = sphi 0, %s24
      %s39 = sphi 0, %s25
      %s43 = sphi 0, %s43
      %s45 = sphi 0, %s43
      %s46 = sphi 0, %s45
      %s60 = sphi 0, %s46
      %s64 = sphi 0, %s64
      %s66 = sphi 0, %s64
      %s67 = sphi 0, %s66
      %s81 = sphi 0, %s67
      %s87 = sphi 0, %s89
      %s90 = sphi 0, %s87
      %s91 = sphi 0, %s90
      %s107 = sphi 0, %s91
    $region4: #{_fused_encoder.1} parent=1 // loop_header_branch
      %17 = sbr.rel (%p15) target = $region8
    $region5: #{_fused_encoder.1} parent=1 // loop_body
      %s19 = ssub.s32 %s14, 1
      %s20 = ssub.s32 %s14, 2
      %s21 = sadd.s32 %s14, 1
      %s23 = sadd.s32 %s22, 1
      %p26 = scmp.eq.s32.totalorder %s14, 1
      %p27 = scmp.ne.s32.totalorder %s22, %s24
      %p28 = scmp.eq.s32.totalorder %s14, 0
      %p29 = por %p27, %p28
      %p30 = scmp.ne.s32.totalorder %s22, %s24
      %p31 = scmp.eq.s32.totalorder %s19, 1
      %p32 = por %p30, %p31
      %p33 = scmp.ne.s32.totalorder %s24, %s25
      %p34 = scmp.eq.s32.totalorder %s19, 0
      %p35 = por %p33, %p34
      %p36 = scmp.ne.s32.totalorder %s24, %s25
      %p37 = scmp.eq.s32.totalorder %s20, 1
      %p38 = por %p36, %p37
      %p40 = scmp.ne.s32.totalorder %s25, %s39
      %p41 = scmp.eq.s32.totalorder %s20, 0
      %p42 = por %p40, %p41
      %s44 = sadd.s32 %s43, 1
      %p47 = scmp.eq.s32.totalorder %s14, 1
      %p48 = scmp.ne.s32.totalorder %s43, %s45
      %p49 = scmp.eq.s32.totalorder %s14, 0
      %p50 = por %p48, %p49
      %p51 = scmp.ne.s32.totalorder %s43, %s45
      %p52 = scmp.eq.s32.totalorder %s19, 1
      %p53 = por %p51, %p52
      %p54 = scmp.ne.s32.totalorder %s45, %s46
      %p55 = scmp.eq.s32.totalorder %s19, 0
      %p56 = por %p54, %p55
      %p57 = scmp.ne.s32.totalorder %s45, %s46
      %p58 = scmp.eq.s32.totalorder %s20, 1
      %p59 = por %p57, %p58
      %p61 = scmp.ne.s32.totalorder %s46, %s60
      %p62 = scmp.eq.s32.totalorder %s20, 0
      %p63 = por %p61, %p62
      %s65 = sadd.s32 %s64, 1
      %p68 = scmp.eq.s32.totalorder %s14, 1
      %p69 = scmp.ne.s32.totalorder %s64, %s66
      %p70 = scmp.eq.s32.totalorder %s14, 0
      %p71 = por %p69, %p70
      %p72 = scmp.ne.s32.totalorder %s64, %s66
      %p73 = scmp.eq.s32.totalorder %s19, 1
      %p74 = por %p72, %p73
      %p75 = scmp.ne.s32.totalorder %s66, %s67
      %p76 = scmp.eq.s32.totalorder %s19, 0
      %p77 = por %p75, %p76
      %p78 = scmp.ne.s32.totalorder %s66, %s67
      %p79 = scmp.eq.s32.totalorder %s20, 1
      %p80 = por %p78, %p79
      %p82 = scmp.ne.s32.totalorder %s67, %s81
      %p83 = scmp.eq.s32.totalorder %s20, 0
      %p84 = por %p82, %p83
      %s85 = ssub.s32 %s14, %s21
      %p86 = scmp.eq.s32.totalorder %s85, 0
      %s88 = sadd.s32 %s87, 1
      %s89 = scalar_select %p86, %s87, %s88
      %p92 = pneg %p86
      %p93 = scmp.eq.s32.totalorder %s14, 1
      %p94 = por %p92, %p93
      %p95 = scmp.ne.s32.totalorder %s87, %s90
      %p96 = scmp.eq.s32.totalorder %s14, 0
      %p97 = por %p95, %p96
      %p98 = scmp.ne.s32.totalorder %s87, %s90
      %p99 = scmp.eq.s32.totalorder %s19, 1
      %p100 = por %p98, %p99
      %p101 = scmp.ne.s32.totalorder %s90, %s91
      %p102 = scmp.eq.s32.totalorder %s19, 0
      %p103 = por %p101, %p102
      %p104 = scmp.ne.s32.totalorder %s90, %s91
      %p105 = scmp.eq.s32.totalorder %s20, 1
      %p106 = por %p104, %p105
      %p108 = scmp.ne.s32.totalorder %s91, %s107
      %p109 = scmp.eq.s32.totalorder %s20, 0
      %p110 = por %p108, %p109
      %p111 = scmp.le.s32.totalorder 1, %s14
      %p112 = scmp.lt.s32.totalorder %s14, 3
      %p113 = pnand %p111, %p112
      %p114 = pneg %p113
      // Predicated region
      $region9: #{_fused_encoder.1} parent=5 // pred_check
        _
      $region10: #{_fused_encoder.1} parent=5 // pred_check_branch
        %116 = sbr.rel (%p113) target = $region12
      $region11: #{_fused_encoder.1} parent=5 // pred_region
        %s117 = ssub.s32 %s14, 1
        // Predicated region
        $region13: #{_fused_encoder.1} parent=11 // pred_check
          %p118 = pneg %p35
        $region14: #{_fused_encoder.1} parent=11 // pred_check_branch
          %120 = sbr.rel (%p118) target = $region16
        $region15: #{_fused_encoder.1} parent=11 // pred_region
          _
        $region16: #{_fused_encoder.1} parent=11 // pred_fallthru
          _
        // Predicated region
        $region17: #{_fused_encoder.1} parent=11 // pred_check
          %p121 = pneg %p56
        $region18: #{_fused_encoder.1} parent=11 // pred_check_branch
          %123 = sbr.rel (%p121) target = $region20
        $region19: #{_fused_encoder.1} parent=11 // pred_region
          _
        $region20: #{_fused_encoder.1} parent=11 // pred_fallthru
          _
      $region12: #{_fused_encoder.1} parent=5 // pred_fallthru
        _
      %p124 = scmp.lt.s32.totalorder %s14, 2
      // Predicated region
      $region21: #{_fused_encoder.1} parent=5 // pred_check
        %p125 = pneg %p124
      $region22: #{_fused_encoder.1} parent=5 // pred_check_branch
        %127 = sbr.rel (%p125) target = $region24
      $region23: #{_fused_encoder.1} parent=5 // pred_region
        _
      $region24: #{_fused_encoder.1} parent=5 // pred_fallthru
        _
      %p128 = scmp.le.s32.totalorder 1, %s14
      %p129 = scmp.lt.s32.totalorder %s14, 3
      %p130 = pnand %p128, %p129
      %p131 = pneg %p130
      // Predicated region
      $region25: #{_fused_encoder.1} parent=5 // pred_check
        _
      $region26: #{_fused_encoder.1} parent=5 // pred_check_branch
        %133 = sbr.rel (%p130) target = $region28
      $region27: #{_fused_encoder.1} parent=5 // pred_region
        %s134 = ssub.s32 %s14, 1
        %p135 = pneg %p35
        %p136 = pneg %p32
        %p137 = pneg %p56
        %p138 = pneg %p53
        %p139 = pneg %p77
        %p140 = pneg %p74
        %p141 = pneg %p103
        %p142 = pneg %p100
        %s143 = sand.u32 %s90, 1
        %s144 = scalar_lea.sflag [#allocation6], %s143
        %s145 = sand.u32 %s90, 1
        %s146 = smul.addr %s145, 256
        %s147 = scalar_lea.vmem [#allocation5], %s146
        %p149 = scmp.eq.s32.totalorder %s19, 0
        // Predicated region
        $region29: #{_fused_encoder.1} parent=27 // pred_check
          %p150 = pneg %p149
        $region30: #{_fused_encoder.1} parent=27 // pred_check_branch
          %152 = sbr.rel (%p150) target = $region32
        $region31: #{_fused_encoder.1} parent=27 // pred_region
          %v153 = vld [vmem:[%s1] sm:$0xff]
          %v154 = vld [vmem:[%s1 + $0x8] sm:$0xff]
          %v155 = vld [vmem:[%s1 + $0x10] sm:$0xff]
          %v156 = vld [vmem:[%s1 + $0x18] sm:$0xff]
          %v157 = vld [vmem:[%s1 + $0x20] sm:$0xff]
          %v158 = vld [vmem:[%s1 + $0x28] sm:$0xff]
          %v159 = vld [vmem:[%s1 + $0x30] sm:$0xff]
          %v160 = vld [vmem:[%s1 + $0x38] sm:$0xff]
          %v161 = vld [vmem:[%s1 + $0x40] sm:$0xff]
          %v162 = vld [vmem:[%s1 + $0x48] sm:$0xff]
          %v163 = vld [vmem:[%s1 + $0x50] sm:$0xff]
          %v164 = vld [vmem:[%s1 + $0x58] sm:$0xff]
          %v165 = vld [vmem:[%s1 + $0x60] sm:$0xff]
          %v166 = vld [vmem:[%s1 + $0x68] sm:$0xff]
          %v167 = vld [vmem:[%s1 + $0x70] sm:$0xff]
          %v168 = vld [vmem:[%s1 + $0x78] sm:$0xff]
          %v169 = vld [vmem:[%s1 + $0x80] sm:$0xff]
          %v170 = vld [vmem:[%s1 + $0x88] sm:$0xff]
          %v171 = vld [vmem:[%s1 + $0x90] sm:$0xff]
          %v172 = vld [vmem:[%s1 + $0x98] sm:$0xff]
          %v173 = vld [vmem:[%s1 + $0xa0] sm:$0xff]
          %v174 = vld [vmem:[%s1 + $0xa8] sm:$0xff]
          %v175 = vld [vmem:[%s1 + $0xb0] sm:$0xff]
          %v176 = vld [vmem:[%s1 + $0xb8] sm:$0xff]
          %v177 = vld [vmem:[%s1 + $0xc0] sm:$0xff]
          %v178 = vld [vmem:[%s1 + $0xc8] sm:$0xff]
          %v179 = vld [vmem:[%s1 + $0xd0] sm:$0xff]
          %v180 = vld [vmem:[%s1 + $0xd8] sm:$0xff]
          %v181 = vld [vmem:[%s1 + $0xe0] sm:$0xff]
          %v182 = vld [vmem:[%s1 + $0xe8] sm:$0xff]
          %v183 = vld [vmem:[%s1 + $0xf0] sm:$0xff]
          %v184 = vld [vmem:[%s1 + $0xf8] sm:$0xff]
          %185 = vst [vmem:[#allocation3] sm:$0xff] %v153
          %186 = vst [vmem:[#allocation3 + $0x8] sm:$0xff] %v154
          %187 = vst [vmem:[#allocation3 + $0x10] sm:$0xff] %v155
          %188 = vst [vmem:[#allocation3 + $0x18] sm:$0xff] %v156
          %189 = vst [vmem:[#allocation3 + $0x20] sm:$0xff] %v157
          %190 = vst [vmem:[#allocation3 + $0x28] sm:$0xff] %v158
          %191 = vst [vmem:[#allocation3 + $0x30] sm:$0xff] %v159
          %192 = vst [vmem:[#allocation3 + $0x38] sm:$0xff] %v160
          %193 = vst [vmem:[#allocation3 + $0x40] sm:$0xff] %v161
          %194 = vst [vmem:[#allocation3 + $0x48] sm:$0xff] %v162
          %195 = vst [vmem:[#allocation3 + $0x50] sm:$0xff] %v163
          %196 = vst [vmem:[#allocation3 + $0x58] sm:$0xff] %v164
          %197 = vst [vmem:[#allocation3 + $0x60] sm:$0xff] %v165
          %198 = vst [vmem:[#allocation3 + $0x68] sm:$0xff] %v166
          %199 = vst [vmem:[#allocation3 + $0x70] sm:$0xff] %v167
          %200 = vst [vmem:[#allocation3 + $0x78] sm:$0xff] %v168
          %201 = vst [vmem:[#allocation3 + $0x80] sm:$0xff] %v169
          %202 = vst [vmem:[#allocation3 + $0x88] sm:$0xff] %v170
          %203 = vst [vmem:[#allocation3 + $0x90] sm:$0xff] %v171
          %204 = vst [vmem:[#allocation3 + $0x98] sm:$0xff] %v172
          %205 = vst [vmem:[#allocation3 + $0xa0] sm:$0xff] %v173
          %206 = vst [vmem:[#allocation3 + $0xa8] sm:$0xff] %v174
          %207 = vst [vmem:[#allocation3 + $0xb0] sm:$0xff] %v175
          %208 = vst [vmem:[#allocation3 + $0xb8] sm:$0xff] %v176
          %209 = vst [vmem:[#allocation3 + $0xc0] sm:$0xff] %v177
          %210 = vst [vmem:[#allocation3 + $0xc8] sm:$0xff] %v178
          %211 = vst [vmem:[#allocation3 + $0xd0] sm:$0xff] %v179
          %212 = vst [vmem:[#allocation3 + $0xd8] sm:$0xff] %v180
          %213 = vst [vmem:[#allocation3 + $0xe0] sm:$0xff] %v181
          %214 = vst [vmem:[#allocation3 + $0xe8] sm:$0xff] %v182
          %215 = vst [vmem:[#allocation3 + $0xf0] sm:$0xff] %v183
          %216 = vst [vmem:[#allocation3 + $0xf8] sm:$0xff] %v184
          %v217 = vpack.c.bf16 %v154, %v153
          %v218 = vpack.c.bf16 %v156, %v155
          %v219 = vpack.c.bf16 %v158, %v157
          %v220 = vpack.c.bf16 %v160, %v159
          %v221 = vpack.c.bf16 %v162, %v161
          %v222 = vpack.c.bf16 %v164, %v163
          %v223 = vpack.c.bf16 %v166, %v165
          %v224 = vpack.c.bf16 %v168, %v167
          %v225 = vpack.c.bf16 %v170, %v169
          %v226 = vpack.c.bf16 %v172, %v171
          %v227 = vpack.c.bf16 %v174, %v173
          %v228 = vpack.c.bf16 %v176, %v175
          %v229 = vpack.c.bf16 %v178, %v177
          %v230 = vpack.c.bf16 %v180, %v179
          %v231 = vpack.c.bf16 %v182, %v181
          %v232 = vpack.c.bf16 %v184, %v183
          %233 = vst [vmem:[#allocation2] sm:$0xff] %v217
          %234 = vst [vmem:[#allocation2 + $0x8] sm:$0xff] %v218
          %235 = vst [vmem:[#allocation2 + $0x10] sm:$0xff] %v219
          %236 = vst [vmem:[#allocation2 + $0x18] sm:$0xff] %v220
          %237 = vst [vmem:[#allocation2 + $0x20] sm:$0xff] %v221
          %238 = vst [vmem:[#allocation2 + $0x28] sm:$0xff] %v222
          %239 = vst [vmem:[#allocation2 + $0x30] sm:$0xff] %v223
          %240 = vst [vmem:[#allocation2 + $0x38] sm:$0xff] %v224
          %241 = vst [vmem:[#allocation2 + $0x40] sm:$0xff] %v225
          %242 = vst [vmem:[#allocation2 + $0x48] sm:$0xff] %v226
          %243 = vst [vmem:[#allocation2 + $0x50] sm:$0xff] %v227
          %244 = vst [vmem:[#allocation2 + $0x58] sm:$0xff] %v228
          %245 = vst [vmem:[#allocation2 + $0x60] sm:$0xff] %v229
          %246 = vst [vmem:[#allocation2 + $0x68] sm:$0xff] %v230
          %247 = vst [vmem:[#allocation2 + $0x70] sm:$0xff] %v231
          %248 = vst [vmem:[#allocation2 + $0x78] sm:$0xff] %v232
        $region32: #{_fused_encoder.1} parent=27 // pred_fallthru
          _
        %v249 = vld [vmem:[%s0] sm:$0xff]
        %v250 = vld [vmem:[%s0 + $0x8] sm:$0xff]
        %v251 = vld [vmem:[%s0 + $0x10] sm:$0xff]
        %v252 = vld [vmem:[%s0 + $0x18] sm:$0xff]
        %v253 = vld [vmem:[%s0 + $0x20] sm:$0xff]
        %v254 = vld [vmem:[%s0 + $0x28] sm:$0xff]
        %v255 = vld [vmem:[%s0 + $0x30] sm:$0xff]
        %v256 = vld [vmem:[%s0 + $0x38] sm:$0xff]
        %v257 = vld [vmem:[%s0 + $0x40] sm:$0xff]
        %v258 = vld [vmem:[%s0 + $0x48] sm:$0xff]
        %v259 = vld [vmem:[%s0 + $0x50] sm:$0xff]
        %v260 = vld [vmem:[%s0 + $0x58] sm:$0xff]
        %v261 = vld [vmem:[%s0 + $0x60] sm:$0xff]
        %v262 = vld [vmem:[%s0 + $0x68] sm:$0xff]
        %v263 = vld [vmem:[%s0 + $0x70] sm:$0xff]
        %v264 = vld [vmem:[%s0 + $0x78] sm:$0xff]
        %v265 = vld [vmem:[%s0 + $0x80] sm:$0xff]
        %v266 = vld [vmem:[%s0 + $0x88] sm:$0xff]
        %v267 = vld [vmem:[%s0 + $0x90] sm:$0xff]
        %v268 = vld [vmem:[%s0 + $0x98] sm:$0xff]
        %v269 = vld [vmem:[%s0 + $0xa0] sm:$0xff]
        %v270 = vld [vmem:[%s0 + $0xa8] sm:$0xff]
        %v271 = vld [vmem:[%s0 + $0xb0] sm:$0xff]
        %v272 = vld [vmem:[%s0 + $0xb8] sm:$0xff]
        %v273 = vld [vmem:[%s0 + $0xc0] sm:$0xff]
        %v274 = vld [vmem:[%s0 + $0xc8] sm:$0xff]
        %v275 = vld [vmem:[%s0 + $0xd0] sm:$0xff]
        %v276 = vld [vmem:[%s0 + $0xd8] sm:$0xff]
        %v277 = vld [vmem:[%s0 + $0xe0] sm:$0xff]
        %v278 = vld [vmem:[%s0 + $0xe8] sm:$0xff]
        %v279 = vld [vmem:[%s0 + $0xf0] sm:$0xff]
        %v280 = vld [vmem:[%s0 + $0xf8] sm:$0xff]
        %v281 = vld [vmem:[#allocation2] sm:$0xff]
        %v282 = vld [vmem:[#allocation2 + $0x8] sm:$0xff]
        %v283 = vld [vmem:[#allocation2 + $0x10] sm:$0xff]
        %v284 = vld [vmem:[#allocation2 + $0x18] sm:$0xff]
        %v285 = vld [vmem:[#allocation2 + $0x20] sm:$0xff]
        %v286 = vld [vmem:[#allocation2 + $0x28] sm:$0xff]
        %v287 = vld [vmem:[#allocation2 + $0x30] sm:$0xff]
        %v288 = vld [vmem:[#allocation2 + $0x38] sm:$0xff]
        %v289 = vld [vmem:[#allocation2 + $0x40] sm:$0xff]
        %v290 = vld [vmem:[#allocation2 + $0x48] sm:$0xff]
        %v291 = vld [vmem:[#allocation2 + $0x50] sm:$0xff]
        %v292 = vld [vmem:[#allocation2 + $0x58] sm:$0xff]
        %v293 = vld [vmem:[#allocation2 + $0x60] sm:$0xff]
        %v294 = vld [vmem:[#allocation2 + $0x68] sm:$0xff]
        %v295 = vld [vmem:[#allocation2 + $0x70] sm:$0xff]
        %v296 = vld [vmem:[#allocation2 + $0x78] sm:$0xff]
        %v329 = vunpack.c.l.b16 %v249
        %v330 = vunpack.c.h.b16 %v249
        %v331 = vunpack.c.l.b16 %v250
        %v332 = vunpack.c.h.b16 %v250
        %v333 = vunpack.c.l.b16 %v251
        %v334 = vunpack.c.h.b16 %v251
        %v335 = vunpack.c.l.b16 %v252
        %v336 = vunpack.c.h.b16 %v252
        %v337 = vunpack.c.l.b16 %v253
        %v338 = vunpack.c.h.b16 %v253
        %v339 = vunpack.c.l.b16 %v254
        %v340 = vunpack.c.h.b16 %v254
        %v341 = vunpack.c.l.b16 %v255
        %v342 = vunpack.c.h.b16 %v255
        %v343 = vunpack.c.l.b16 %v256
        %v344 = vunpack.c.h.b16 %v256
        %v345 = vunpack.c.l.b16 %v257
        %v346 = vunpack.c.h.b16 %v257
        %v347 = vunpack.c.l.b16 %v258
        %v348 = vunpack.c.h.b16 %v258
        %v349 = vunpack.c.l.b16 %v259
        %v350 = vunpack.c.h.b16 %v259
        %v351 = vunpack.c.l.b16 %v260
        %v352 = vunpack.c.h.b16 %v260
        %v353 = vunpack.c.l.b16 %v261
        %v354 = vunpack.c.h.b16 %v261
        %v355 = vunpack.c.l.b16 %v262
        %v356 = vunpack.c.h.b16 %v262
        %v357 = vunpack.c.l.b16 %v263
        %v358 = vunpack.c.h.b16 %v263
        %v359 = vunpack.c.l.b16 %v264
        %v360 = vunpack.c.h.b16 %v264
        %v361 = vunpack.c.l.b16 %v265
        %v362 = vunpack.c.h.b16 %v265
        %v363 = vunpack.c.l.b16 %v266
        %v364 = vunpack.c.h.b16 %v266
        %v365 = vunpack.c.l.b16 %v267
        %v366 = vunpack.c.h.b16 %v267
        %v367 = vunpack.c.l.b16 %v268
        %v368 = vunpack.c.h.b16 %v268
        %v369 = vunpack.c.l.b16 %v269
        %v370 = vunpack.c.h.b16 %v269
        %v371 = vunpack.c.l.b16 %v270
        %v372 = vunpack.c.h.b16 %v270
        %v373 = vunpack.c.l.b16 %v271
        %v374 = vunpack.c.h.b16 %v271
        %v375 = vunpack.c.l.b16 %v272
        %v376 = vunpack.c.h.b16 %v272
        %v377 = vunpack.c.l.b16 %v273
        %v378 = vunpack.c.h.b16 %v273
        %v379 = vunpack.c.l.b16 %v274
        %v380 = vunpack.c.h.b16 %v274
        %v381 = vunpack.c.l.b16 %v275
        %v382 = vunpack.c.h.b16 %v275
        %v383 = vunpack.c.l.b16 %v276
        %v384 = vunpack.c.h.b16 %v276
        %v385 = vunpack.c.l.b16 %v277
        %v386 = vunpack.c.h.b16 %v277
        %v387 = vunpack.c.l.b16 %v278
        %v388 = vunpack.c.h.b16 %v278
        %v389 = vunpack.c.l.b16 %v279
        %v390 = vunpack.c.h.b16 %v279
        %v391 = vunpack.c.l.b16 %v280
        %v392 = vunpack.c.h.b16 %v280
        %v393 = vpack.c.b16 %v331, %v329
        %v394 = vpack.c.b16 %v332, %v330
        %v395 = vpack.c.b16 %v335, %v333
        %v396 = vpack.c.b16 %v336, %v334
        %v397 = vpack.c.b16 %v339, %v337
        %v398 = vpack.c.b16 %v340, %v338
        %v399 = vpack.c.b16 %v343, %v341
        %v400 = vpack.c.b16 %v344, %v342
        %v401 = vpack.c.b16 %v347, %v345
        %v402 = vpack.c.b16 %v348, %v346
        %v403 = vpack.c.b16 %v351, %v349
        %v404 = vpack.c.b16 %v352, %v350
        %v405 = vpack.c.b16 %v355, %v353
        %v406 = vpack.c.b16 %v356, %v354
        %v407 = vpack.c.b16 %v359, %v357
        %v408 = vpack.c.b16 %v360, %v358
        %v409 = vpack.c.b16 %v363, %v361
        %v410 = vpack.c.b16 %v364, %v362
        %v411 = vpack.c.b16 %v367, %v365
        %v412 = vpack.c.b16 %v368, %v366
        %v413 = vpack.c.b16 %v371, %v369
        %v414 = vpack.c.b16 %v372, %v370
        %v415 = vpack.c.b16 %v375, %v373
        %v416 = vpack.c.b16 %v376, %v374
        %v417 = vpack.c.b16 %v379, %v377
        %v418 = vpack.c.b16 %v380, %v378
        %v419 = vpack.c.b16 %v383, %v381
        %v420 = vpack.c.b16 %v384, %v382
        %v421 = vpack.c.b16 %v387, %v385
        %v422 = vpack.c.b16 %v388, %v386
        %v423 = vpack.c.b16 %v391, %v389
        %v424 = vpack.c.b16 %v392, %v390
        %457 = vmatprep.subr.bf16.mxu0 0
        %458 = vmatpush1.bf16.msra.mxu0 %v281
        %459 = vmatprep.subr.bf16.mxu0 0
        %460 = vmatpush1.bf16.msra.mxu0 %v282
        %461 = vmatprep.subr.bf16.mxu0 0
        %462 = vmatpush1.bf16.msra.mxu0 %v283
        %463 = vmatprep.subr.bf16.mxu0 0
        %464 = vmatpush1.bf16.msra.mxu0 %v284
        %465 = vmatprep.subr.bf16.mxu0 0
        %466 = vmatpush1.bf16.msra.mxu0 %v285
        %467 = vmatprep.subr.bf16.mxu0 0
        %468 = vmatpush1.bf16.msra.mxu0 %v286
        %469 = vmatprep.subr.bf16.mxu0 0
        %470 = vmatpush1.bf16.msra.mxu0 %v287
        %471 = vmatprep.subr.bf16.mxu0 0
        %472 = vmatpush1.bf16.msra.mxu0 %v288
        %473 = vmatprep.subr.bf16.mxu0 0
        %474 = vmatpush1.bf16.msra.mxu0 %v289
        %475 = vmatprep.subr.bf16.mxu0 0
        %476 = vmatpush1.bf16.msra.mxu0 %v290
        %477 = vmatprep.subr.bf16.mxu0 0
        %478 = vmatpush1.bf16.msra.mxu0 %v291
        %479 = vmatprep.subr.bf16.mxu0 0
        %480 = vmatpush1.bf16.msra.mxu0 %v292
        %481 = vmatprep.subr.bf16.mxu0 0
        %482 = vmatpush1.bf16.msra.mxu0 %v293
        %483 = vmatprep.subr.bf16.mxu0 0
        %484 = vmatpush1.bf16.msra.mxu0 %v294
        %485 = vmatprep.subr.bf16.mxu0 0
        %486 = vmatpush1.bf16.msra.mxu0 %v295
        %487 = vmatprep.subr.bf16.mxu0 0
        %488 = vmatpush1.bf16.msra.mxu0 %v296
        %489 = vmatprep.mubr.bf16.mxu0 %v394
        %490 = vmatmul.mubr.bf16.gmra.mrb[0].mxu0 %v393
        %v491 = vpop.f32.mrb[0].mxu0
        %v492 = vadd.f32 0.0, %v491
        %v493 = vpop.f32.mrb[0].mxu0
        %v494 = vpop.f32.mrb[0].mxu0
        %v495 = vadd.f32 0.0, %v494
        %v496 = vpop.f32.mrb[0].mxu0
        %497 = vmatprep.mubr.bf16.mxu0 %v396
        %498 = vmatmul.mubr.bf16.gmra.mrb[0].mxu0 %v395
        %v499 = vpop.f32.mrb[0].mxu0
        %v500 = vadd.f32 0.0, %v499
        %v501 = vpop.f32.mrb[0].mxu0
        %v502 = vpop.f32.mrb[0].mxu0
        %v503 = vadd.f32 0.0, %v502
        %v504 = vpop.f32.mrb[0].mxu0
        %505 = vmatprep.mubr.bf16.mxu0 %v398
        %506 = vmatmul.mubr.bf16.gmra.mrb[0].mxu0 %v397
        %v507 = vpop.f32.mrb[0].mxu0
        %v508 = vadd.f32 0.0, %v507
        %v509 = vpop.f32.mrb[0].mxu0
        %v510 = vpop.f32.mrb[0].mxu0
        %v511 = vadd.f32 0.0, %v510
        %v512 = vpop.f32.mrb[0].mxu0
        %513 = vmatprep.mubr.bf16.mxu0 %v400
        %514 = vmatmul.mubr.bf16.gmra.mrb[0].mxu0 %v399
        %v515 = vpop.f32.mrb[0].mxu0
        %v516 = vadd.f32 0.0, %v515
        %v517 = vpop.f32.mrb[0].mxu0
        %v518 = vpop.f32.mrb[0].mxu0
        %v519 = vadd.f32 0.0, %v518
        %v520 = vpop.f32.mrb[0].mxu0
        %521 = vmatprep.mubr.bf16.mxu0 %v402
        %522 = vmatmul.mubr.bf16.gmra.mrb[0].mxu0 %v401
        %v523 = vpop.f32.mrb[0].mxu0
        %v524 = vadd.f32 0.0, %v523
        %v525 = vpop.f32.mrb[0].mxu0
        %v526 = vpop.f32.mrb[0].mxu0
        %v527 = vadd.f32 0.0, %v526
        %v528 = vpop.f32.mrb[0].mxu0
        %529 = vmatprep.mubr.bf16.mxu0 %v404
        %530 = vmatmul.mubr.bf16.gmra.mrb[0].mxu0 %v403
        %v531 = vpop.f32.mrb[0].mxu0
        %v532 = vadd.f32 0.0, %v531
        %v533 = vpop.f32.mrb[0].mxu0
        %v534 = vpop.f32.mrb[0].mxu0
        %v535 = vadd.f32 0.0, %v534
        %v536 = vpop.f32.mrb[0].mxu0
        %537 = vmatprep.mubr.bf16.mxu0 %v406
        %538 = vmatmul.mubr.bf16.gmra.mrb[0].mxu0 %v405
        %v539 = vpop.f32.mrb[0].mxu0
        %v540 = vadd.f32 0.0, %v539
        %v541 = vpop.f32.mrb[0].mxu0
        %v542 = vpop.f32.mrb[0].mxu0
        %v543 = vadd.f32 0.0, %v542
        %v544 = vpop.f32.mrb[0].mxu0
        %545 = vmatprep.mubr.bf16.mxu0 %v408
        %546 = vmatmul.mubr.bf16.gmra.mrb[0].mxu0 %v407
        %v547 = vpop.f32.mrb[0].mxu0
        %v548 = vadd.f32 0.0, %v547
        %v549 = vpop.f32.mrb[0].mxu0
        %v550 = vpop.f32.mrb[0].mxu0
        %v551 = vadd.f32 0.0, %v550
        %v552 = vpop.f32.mrb[0].mxu0
        %553 = vmatprep.mubr.bf16.mxu0 %v410
        %554 = vmatmul.mubr.bf16.gmra.mrb[0].mxu0 %v409
        %v555 = vpop.f32.mrb[0].mxu0
        %v556 = vadd.f32 0.0, %v555
        %v557 = vpop.f32.mrb[0].mxu0
        %v558 = vpop.f32.mrb[0].mxu0
        %v559 = vadd.f32 0.0, %v558
        %v560 = vpop.f32.mrb[0].mxu0
        %561 = vmatprep.mubr.bf16.mxu0 %v412
        %562 = vmatmul.mubr.bf16.gmra.mrb[0].mxu0 %v411
        %v563 = vpop.f32.mrb[0].mxu0
        %v564 = vadd.f32 0.0, %v563
        %v565 = vpop.f32.mrb[0].mxu0
        %v566 = vpop.f32.mrb[0].mxu0
        %v567 = vadd.f32 0.0, %v566
        %v568 = vpop.f32.mrb[0].mxu0
        %569 = vmatprep.mubr.bf16.mxu0 %v414
        %570 = vmatmul.mubr.bf16.gmra.mrb[0].mxu0 %v413
        %v571 = vpop.f32.mrb[0].mxu0
        %v572 = vadd.f32 0.0, %v571
        %v573 = vpop.f32.mrb[0].mxu0
        %v574 = vpop.f32.mrb[0].mxu0
        %v575 = vadd.f32 0.0, %v574
        %v576 = vpop.f32.mrb[0].mxu0
        %577 = vmatprep.mubr.bf16.mxu0 %v416
        %578 = vmatmul.mubr.bf16.gmra.mrb[0].mxu0 %v415
        %v579 = vpop.f32.mrb[0].mxu0
        %v580 = vadd.f32 0.0, %v579
        %v581 = vpop.f32.mrb[0].mxu0
        %v582 = vpop.f32.mrb[0].mxu0
        %v583 = vadd.f32 0.0, %v582
        %v584 = vpop.f32.mrb[0].mxu0
        %585 = vmatprep.mubr.bf16.mxu0 %v418
        %586 = vmatmul.mubr.bf16.gmra.mrb[0].mxu0 %v417
        %v587 = vpop.f32.mrb[0].mxu0
        %v588 = vadd.f32 0.0, %v587
        %v589 = vpop.f32.mrb[0].mxu0
        %v590 = vpop.f32.mrb[0].mxu0
        %v591 = vadd.f32 0.0, %v590
        %v592 = vpop.f32.mrb[0].mxu0
        %593 = vmatprep.mubr.bf16.mxu0 %v420
        %594 = vmatmul.mubr.bf16.gmra.mrb[0].mxu0 %v419
        %v595 = vpop.f32.mrb[0].mxu0
        %v596 = vadd.f32 0.0, %v595
        %v597 = vpop.f32.mrb[0].mxu0
        %v598 = vpop.f32.mrb[0].mxu0
        %v599 = vadd.f32 0.0, %v598
        %v600 = vpop.f32.mrb[0].mxu0
        %601 = vmatprep.mubr.bf16.mxu0 %v422
        %602 = vmatmul.mubr.bf16.gmra.mrb[0].mxu0 %v421
        %v603 = vpop.f32.mrb[0].mxu0
        %v604 = vadd.f32 0.0, %v603
        %v605 = vpop.f32.mrb[0].mxu0
        %v606 = vpop.f32.mrb[0].mxu0
        %v607 = vadd.f32 0.0, %v606
        %v608 = vpop.f32.mrb[0].mxu0
        %609 = vmatprep.mubr.bf16.mxu0 %v424
        %610 = vmatmul.mubr.bf16.gmra.mrb[0].mxu0 %v423
        %v611 = vpop.f32.mrb[0].mxu0
        %v612 = vadd.f32 0.0, %v611
        %v613 = vpop.f32.mrb[0].mxu0
        %v614 = vpop.f32.mrb[0].mxu0
        %v615 = vadd.f32 0.0, %v614
        %v616 = vpop.f32.mrb[0].mxu0
        %617 = vdwg.mxu0
        %v618 = vld [vmem:[#allocation3] sm:$0xff]
        %v619 = vld [vmem:[#allocation3 + $0x8] sm:$0xff]
        %v620 = vld [vmem:[#allocation3 + $0x10] sm:$0xff]
        %v621 = vld [vmem:[#allocation3 + $0x18] sm:$0xff]
        %v622 = vld [vmem:[#allocation3 + $0x20] sm:$0xff]
        %v623 = vld [vmem:[#allocation3 + $0x28] sm:$0xff]
        %v624 = vld [vmem:[#allocation3 + $0x30] sm:$0xff]
        %v625 = vld [vmem:[#allocation3 + $0x38] sm:$0xff]
        %v626 = vld [vmem:[#allocation3 + $0x40] sm:$0xff]
        %v627 = vld [vmem:[#allocation3 + $0x48] sm:$0xff]
        %v628 = vld [vmem:[#allocation3 + $0x50] sm:$0xff]
        %v629 = vld [vmem:[#allocation3 + $0x58] sm:$0xff]
        %v630 = vld [vmem:[#allocation3 + $0x60] sm:$0xff]
        %v631 = vld [vmem:[#allocation3 + $0x68] sm:$0xff]
        %v632 = vld [vmem:[#allocation3 + $0x70] sm:$0xff]
        %v633 = vld [vmem:[#allocation3 + $0x78] sm:$0xff]
        %v634 = vld [vmem:[#allocation3 + $0x80] sm:$0xff]
        %v635 = vld [vmem:[#allocation3 + $0x88] sm:$0xff]
        %v636 = vld [vmem:[#allocation3 + $0x90] sm:$0xff]
        %v637 = vld [vmem:[#allocation3 + $0x98] sm:$0xff]
        %v638 = vld [vmem:[#allocation3 + $0xa0] sm:$0xff]
        %v639 = vld [vmem:[#allocation3 + $0xa8] sm:$0xff]
        %v640 = vld [vmem:[#allocation3 + $0xb0] sm:$0xff]
        %v641 = vld [vmem:[#allocation3 + $0xb8] sm:$0xff]
        %v642 = vld [vmem:[#allocation3 + $0xc0] sm:$0xff]
        %v643 = vld [vmem:[#allocation3 + $0xc8] sm:$0xff]
        %v644 = vld [vmem:[#allocation3 + $0xd0] sm:$0xff]
        %v645 = vld [vmem:[#allocation3 + $0xd8] sm:$0xff]
        %v646 = vld [vmem:[#allocation3 + $0xe0] sm:$0xff]
        %v647 = vld [vmem:[#allocation3 + $0xe8] sm:$0xff]
        %v648 = vld [vmem:[#allocation3 + $0xf0] sm:$0xff]
        %v649 = vld [vmem:[#allocation3 + $0xf8] sm:$0xff]
        %v650 = vadd.f32 %v618, %v492
        %v651 = vadd.f32 %v619, %v495
        %v652 = vadd.f32 %v620, %v500
        %v653 = vadd.f32 %v621, %v503
        %v654 = vadd.f32 %v622, %v508
        %v655 = vadd.f32 %v623, %v511
        %v656 = vadd.f32 %v624, %v516
        %v657 = vadd.f32 %v625, %v519
        %v658 = vadd.f32 %v626, %v524
        %v659 = vadd.f32 %v627, %v527
        %v660 = vadd.f32 %v628, %v532
        %v661 = vadd.f32 %v629, %v535
        %v662 = vadd.f32 %v630, %v540
        %v663 = vadd.f32 %v631, %v543
        %v664 = vadd.f32 %v632, %v548
        %v665 = vadd.f32 %v633, %v551
        %v666 = vadd.f32 %v634, %v556
        %v667 = vadd.f32 %v635, %v559
        %v668 = vadd.f32 %v636, %v564
        %v669 = vadd.f32 %v637, %v567
        %v670 = vadd.f32 %v638, %v572
        %v671 = vadd.f32 %v639, %v575
        %v672 = vadd.f32 %v640, %v580
        %v673 = vadd.f32 %v641, %v583
        %v674 = vadd.f32 %v642, %v588
        %v675 = vadd.f32 %v643, %v591
        %v676 = vadd.f32 %v644, %v596
        %v677 = vadd.f32 %v645, %v599
        %v678 = vadd.f32 %v646, %v604
        %v679 = vadd.f32 %v647, %v607
        %v680 = vadd.f32 %v648, %v612
        %v681 = vadd.f32 %v649, %v615
        %682 = vst [vmem:[#allocation3] sm:$0xff] %v650
        %683 = vst [vmem:[#allocation3 + $0x8] sm:$0xff] %v651
        %684 = vst [vmem:[#allocation3 + $0x10] sm:$0xff] %v652
        %685 = vst [vmem:[#allocation3 + $0x18] sm:$0xff] %v653
        %686 = vst [vmem:[#allocation3 + $0x20] sm:$0xff] %v654
        %687 = vst [vmem:[#allocation3 + $0x28] sm:$0xff] %v655
        %688 = vst [vmem:[#allocation3 + $0x30] sm:$0xff] %v656
        %689 = vst [vmem:[#allocation3 + $0x38] sm:$0xff] %v657
        %690 = vst [vmem:[#allocation3 + $0x40] sm:$0xff] %v658
        %691 = vst [vmem:[#allocation3 + $0x48] sm:$0xff] %v659
        %692 = vst [vmem:[#allocation3 + $0x50] sm:$0xff] %v660
        %693 = vst [vmem:[#allocation3 + $0x58] sm:$0xff] %v661
        %694 = vst [vmem:[#allocation3 + $0x60] sm:$0xff] %v662
        %695 = vst [vmem:[#allocation3 + $0x68] sm:$0xff] %v663
        %696 = vst [vmem:[#allocation3 + $0x70] sm:$0xff] %v664
        %697 = vst [vmem:[#allocation3 + $0x78] sm:$0xff] %v665
        %698 = vst [vmem:[#allocation3 + $0x80] sm:$0xff] %v666
        %699 = vst [vmem:[#allocation3 + $0x88] sm:$0xff] %v667
        %700 = vst [vmem:[#allocation3 + $0x90] sm:$0xff] %v668
        %701 = vst [vmem:[#allocation3 + $0x98] sm:$0xff] %v669
        %702 = vst [vmem:[#allocation3 + $0xa0] sm:$0xff] %v670
        %703 = vst [vmem:[#allocation3 + $0xa8] sm:$0xff] %v671
        %704 = vst [vmem:[#allocation3 + $0xb0] sm:$0xff] %v672
        %705 = vst [vmem:[#allocation3 + $0xb8] sm:$0xff] %v673
        %706 = vst [vmem:[#allocation3 + $0xc0] sm:$0xff] %v674
        %707 = vst [vmem:[#allocation3 + $0xc8] sm:$0xff] %v675
        %708 = vst [vmem:[#allocation3 + $0xd0] sm:$0xff] %v676
        %709 = vst [vmem:[#allocation3 + $0xd8] sm:$0xff] %v677
        %710 = vst [vmem:[#allocation3 + $0xe0] sm:$0xff] %v678
        %711 = vst [vmem:[#allocation3 + $0xe8] sm:$0xff] %v679
        %712 = vst [vmem:[#allocation3 + $0xf0] sm:$0xff] %v680
        %713 = vst [vmem:[#allocation3 + $0xf8] sm:$0xff] %v681
        %v714 = vpack.c.bf16 %v495, %v492
        %v715 = vpack.c.bf16 %v503, %v500
        %v716 = vpack.c.bf16 %v511, %v508
        %v717 = vpack.c.bf16 %v519, %v516
        %v718 = vpack.c.bf16 %v527, %v524
        %v719 = vpack.c.bf16 %v535, %v532
        %v720 = vpack.c.bf16 %v543, %v540
        %v721 = vpack.c.bf16 %v551, %v548
        %v722 = vpack.c.bf16 %v559, %v556
        %v723 = vpack.c.bf16 %v567, %v564
        %v724 = vpack.c.bf16 %v575, %v572
        %v725 = vpack.c.bf16 %v583, %v580
        %v726 = vpack.c.bf16 %v591, %v588
        %v727 = vpack.c.bf16 %v599, %v596
        %v728 = vpack.c.bf16 %v607, %v604
        %v729 = vpack.c.bf16 %v615, %v612
        %730 = vst [vmem:[#allocation2] sm:$0xff] %v714
        %731 = vst [vmem:[#allocation2 + $0x8] sm:$0xff] %v715
        %732 = vst [vmem:[#allocation2 + $0x10] sm:$0xff] %v716
        %733 = vst [vmem:[#allocation2 + $0x18] sm:$0xff] %v717
        %734 = vst [vmem:[#allocation2 + $0x20] sm:$0xff] %v718
        %735 = vst [vmem:[#allocation2 + $0x28] sm:$0xff] %v719
        %736 = vst [vmem:[#allocation2 + $0x30] sm:$0xff] %v720
        %737 = vst [vmem:[#allocation2 + $0x38] sm:$0xff] %v721
        %738 = vst [vmem:[#allocation2 + $0x40] sm:$0xff] %v722
        %739 = vst [vmem:[#allocation2 + $0x48] sm:$0xff] %v723
        %740 = vst [vmem:[#allocation2 + $0x50] sm:$0xff] %v724
        %741 = vst [vmem:[#allocation2 + $0x58] sm:$0xff] %v725
        %742 = vst [vmem:[#allocation2 + $0x60] sm:$0xff] %v726
        %743 = vst [vmem:[#allocation2 + $0x68] sm:$0xff] %v727
        %744 = vst [vmem:[#allocation2 + $0x70] sm:$0xff] %v728
        %745 = vst [vmem:[#allocation2 + $0x78] sm:$0xff] %v729
        %746 = vst [vmem:[%s147] sm:$0xff] %v492
        %747 = vst [vmem:[%s147 + $0x8] sm:$0xff] %v495
        %748 = vst [vmem:[%s147 + $0x10] sm:$0xff] %v500
        %749 = vst [vmem:[%s147 + $0x18] sm:$0xff] %v503
        %750 = vst [vmem:[%s147 + $0x20] sm:$0xff] %v508
        %751 = vst [vmem:[%s147 + $0x28] sm:$0xff] %v511
        %752 = vst [vmem:[%s147 + $0x30] sm:$0xff] %v516
        %753 = vst [vmem:[%s147 + $0x38] sm:$0xff] %v519
        %754 = vst [vmem:[%s147 + $0x40] sm:$0xff] %v524
        %755 = vst [vmem:[%s147 + $0x48] sm:$0xff] %v527
        %756 = vst [vmem:[%s147 + $0x50] sm:$0xff] %v532
        %757 = vst [vmem:[%s147 + $0x58] sm:$0xff] %v535
        %758 = vst [vmem:[%s147 + $0x60] sm:$0xff] %v540
        %759 = vst [vmem:[%s147 + $0x68] sm:$0xff] %v543
        %760 = vst [vmem:[%s147 + $0x70] sm:$0xff] %v548
        %761 = vst [vmem:[%s147 + $0x78] sm:$0xff] %v551
        %762 = vst [vmem:[%s147 + $0x80] sm:$0xff] %v556
        %763 = vst [vmem:[%s147 + $0x88] sm:$0xff] %v559
        %764 = vst [vmem:[%s147 + $0x90] sm:$0xff] %v564
        %765 = vst [vmem:[%s147 + $0x98] sm:$0xff] %v567
        %766 = vst [vmem:[%s147 + $0xa0] sm:$0xff] %v572
        %767 = vst [vmem:[%s147 + $0xa8] sm:$0xff] %v575
        %768 = vst [vmem:[%s147 + $0xb0] sm:$0xff] %v580
        %769 = vst [vmem:[%s147 + $0xb8] sm:$0xff] %v583
        %770 = vst [vmem:[%s147 + $0xc0] sm:$0xff] %v588
        %771 = vst [vmem:[%s147 + $0xc8] sm:$0xff] %v591
        %772 = vst [vmem:[%s147 + $0xd0] sm:$0xff] %v596
        %773 = vst [vmem:[%s147 + $0xd8] sm:$0xff] %v599
        %774 = vst [vmem:[%s147 + $0xe0] sm:$0xff] %v604
        %775 = vst [vmem:[%s147 + $0xe8] sm:$0xff] %v607
        %776 = vst [vmem:[%s147 + $0xf0] sm:$0xff] %v612
        %777 = vst [vmem:[%s147 + $0xf8] sm:$0xff] %v615
        %s778 = sand.u32 %s90, 1
        %s779 = scalar_lea.sflag [#allocation6], %s778
        %s780 = sand.u32 %s90, 1
        %s781 = smul.addr %s780, 256
        %s782 = scalar_lea.vmem [#allocation5], %s781
        // Predicated region
        $region33: #{_fused_encoder.1} parent=27 // pred_check
          %p783 = pneg %p74
        $region34: #{_fused_encoder.1} parent=27 // pred_check_branch
          %785 = sbr.rel (%p783) target = $region36
        $region35: #{_fused_encoder.1} parent=27 // pred_region
          %s787 = ssub.s32 4096, 4096
          %788 = vsyncadd [#allocation4], %s787
          %s789 = sshll.u32 [#allocation3], 4
          %s790 = int_to_ptr.vmem [resolvable:$true] %s789
          %795 = dma.vmem_to_hbm [thread:$0]  %s790, 4096, %s2, [#allocation4], 128, 128, 8
        $region36: #{_fused_encoder.1} parent=27 // pred_fallthru
          _
        // Predicated region
        $region37: #{_fused_encoder.1} parent=27 // pred_check
          %p796 = pneg %p100
        $region38: #{_fused_encoder.1} parent=27 // pred_check_branch
          %798 = sbr.rel (%p796) target = $region40
        $region39: #{_fused_encoder.1} parent=27 // pred_region
          %s800 = ssub.s32 4096, 4096
          %801 = vsyncadd %s779, %s800
          %s802 = smul.addr %s19, 32
          %s803 = smul.addr %s802, 128
          %s804 = scalar_lea.hbm %s3, %s803
          %s805 = sshll.u32 %s782, 4
          %s806 = int_to_ptr.vmem [resolvable:$true] %s805
          %811 = dma.vmem_to_hbm [thread:$0]  %s806, 4096, %s804, %s779, 128, 128, 8
        $region40: #{_fused_encoder.1} parent=27 // pred_fallthru
          _
        // Predicated region
        $region41: #{_fused_encoder.1} parent=27 // pred_check
          %p812 = pneg %p74
        $region42: #{_fused_encoder.1} parent=27 // pred_check_branch
          %814 = sbr.rel (%p812) target = $region44
        $region43: #{_fused_encoder.1} parent=27 // pred_region
          %815 = dma.done [#allocation4], 4096
        $region44: #{_fused_encoder.1} parent=27 // pred_fallthru
          _
      $region28: #{_fused_encoder.1} parent=5 // pred_fallthru
        _
      %p816 = scmp.le.s32.totalorder 2, %s14
      // Predicated region
      $region45: #{_fused_encoder.1} parent=5 // pred_check
        %p817 = pneg %p816
      $region46: #{_fused_encoder.1} parent=5 // pred_check_branch
        %819 = sbr.rel (%p817) target = $region48
      $region47: #{_fused_encoder.1} parent=5 // pred_region
        %s820 = ssub.s32 %s14, 2
        // Predicated region
        $region49: #{_fused_encoder.1} parent=47 // pred_check
          %p821 = pneg %p106
        $region50: #{_fused_encoder.1} parent=47 // pred_check_branch
          %823 = sbr.rel (%p821) target = $region52
        $region51: #{_fused_encoder.1} parent=47 // pred_region
          %s824 = sand.u32 %s91, 1
          %s825 = scalar_lea.sflag [#allocation6], %s824
          %s826 = sand.u32 %s91, 1
          %s827 = smul.addr %s826, 256
          %s828 = scalar_lea.vmem [#allocation5], %s827
          %829 = dma.done %s825, 4096
        $region52: #{_fused_encoder.1} parent=47 // pred_fallthru
          _
      $region48: #{_fused_encoder.1} parent=5 // pred_fallthru
        _
    $region6: #{_fused_encoder.1} parent=1 // loop_footer
      %s18 = sadd.s32 1, %s14
    $region7: #{_fused_encoder.1} parent=1 // loop_footer_branch
      %13 = sbr.rel target = $region3
    $region8: #{_fused_encoder.1} parent=1 // loop_exit
      _
    %830 = vsyncpa [#allocation4], 1
    %s831 = scalar_lea.sflag [#allocation4], 1
    %832 = vsyncpa %s831, 1
    %833 = vsyncpa [#allocation6], 1
    %s834 = scalar_lea.sflag [#allocation6], 1
    %835 = vsyncpa %s834, 1

</llo_original>
